<compile_context>
chip_gen: v7x
topology: tpu7x:2x2x1
jax: 0.10.0
libtpu: 0.0.40
codegen_flags: <defaults>
</compile_context>

<pallas_src>
import functools

import jax
import jax.numpy as jnp
from jax.experimental import pallas as pl
from jax.experimental.pallas import tpu as pltpu


_OPS = ("concat", "mean", "max", "multiply", "multiply1")


# ---------------------------------------------------------------------------
# Tile planning helpers.
# ---------------------------------------------------------------------------

def _round_up(x, m):
    return ((x + m - 1) // m) * m


def _sublane_multiple(itemsize):
    # Sub-32-bit dtypes pack along sublanes: native tiles are (8,128) for f32,
    # (16,128) for bf16, (32,128) for int8/fp8.
    return {1: 32, 2: 16}.get(itemsize, 8)


def _vmem_block_bytes(lead, second_minor, minor, itemsize):
    sub = _sublane_multiple(itemsize)
    return lead * _round_up(max(second_minor, 1), sub) * _round_up(max(minor, 1), 128) * itemsize


def _tile_footprint(tc, ts, S, itemsize, out_planes, flatten):
    """Double-buffered VMEM bytes for one grid step's blocks."""
    in_b = _vmem_block_bytes(1, tc, S, itemsize)                      # (1, tc, S)
    row_b = _vmem_block_bytes(1, tc, ts, itemsize) if ts < S else 0   # (1, tc, ts)
    if flatten:
        out_b = _vmem_block_bytes(out_planes, tc, S * S, itemsize)    # (1,[2,]tc,S*S)
    else:
        out_b = _vmem_block_bytes(out_planes * tc, ts, S, itemsize)   # (1,[2,]tc,ts,S)
    return 2 * (in_b + row_b + out_b)                                 # 2x: double buffering


def _vmem_budget():
    """Generation-aware block budget / scoped-VMEM limit."""
    try:
        cap = int(pltpu.get_tpu_info().vmem_capacity_bytes)
    except Exception:
        cap = 64 << 20                      # conservative (v7x-sized) fallback
    # Writeback-bound op: the only lever is big contiguous output blocks.
    # ~48 MiB double-buffered footprint on v5e/v6e (128 MiB VMEM) and at most
    # 3/4 of physical on v7x (64 MiB VMEM) -> also 48 MiB.
    budget = min(48 << 20, (cap * 3) // 4)
    stretch = max(budget, cap - (16 << 20))   # last resort for extreme S
    return cap, budget, stretch


def _plan_tiles(B, C, S, itemsize, out_planes, flatten, budget, stretch_budget):
    sub = _sublane_multiple(itemsize)

    def fp(tc, ts):
        return _tile_footprint(tc, ts, S, itemsize, out_planes, flatten)

    tc, ts = C, S

    if fp(tc, ts) > budget:
        # Shrink the channel tile in multiples of the dtype's sublane packing.
        if C >= sub:
            per_c = max(1, fp(sub, S) // sub)
            guess = (budget // per_c) // sub * sub
            tc = max(sub, min((C // sub) * sub, guess))
            while tc > sub and fp(tc, S) > budget:
                tc -= sub
        else:
            tc = C

    if fp(tc, ts) > budget:
        # Even the minimum channel tile is too large at full S: tile the output
        # rows.  ts stays a multiple of 128 so the row-source input block
        # (1, tc, ts) keeps a 128-aligned lane dimension.
        tc = min(sub, C)
        eff = budget if fp(tc, 128) <= budget else max(budget, stretch_budget)
        in2 = 2 * _vmem_block_bytes(1, tc, S, itemsize)
        per_r = max(1, (fp(tc, 128) - in2) // 128)
        ts = min(S, max(128, ((eff - in2) // per_r) // 128 * 128))
        while ts > 128 and fp(tc, ts) > eff:
            ts -= 128
        # TODO(synk): a second-level lane tiling would be needed if even
        # (tc=min, ts=128) exceeds physical VMEM (S ~> 7000 on v7x in f32).

    # Keep at least two grid steps so both v7x TensorCores get work (all grid
    # axes are "parallel"); neutral on single-TensorCore v5e/v6e.
    if B * pl.cdiv(C, tc) * pl.cdiv(S, ts) < 2:
        if C >= 2 * sub:
            tc = max(sub, (pl.cdiv(C, 2) // sub) * sub)
        elif (not flatten) and ts == S and S >= 256:
            ts = max(128, (pl.cdiv(S, 2) // 128) * 128)

    return int(tc), int(ts)


# ---------------------------------------------------------------------------
# Kernels.
# ---------------------------------------------------------------------------

def _precondition(v, operation):
    # Hoist the scalar part of the op onto the small pre-broadcast tile.
    if operation == "mean":
        return v * jnp.asarray(0.5, v.dtype)     # a/2 + b/2 == (a+b)/2 exactly
    if operation == "multiply1":
        return v + jnp.asarray(1, v.dtype)
    return v


def _combine(t1, t2, operation, out_dtype):
    if operation == "mean":
        r = t1 + t2
    elif operation == "max":
        r = jnp.maximum(t1, t2)
    elif operation == "multiply":
        r = t1 * t2
    elif operation == "multiply1":
        r = t1 * t2 - jnp.asarray(1, t1.dtype)
    else:
        raise ValueError(operation)
    return r.astype(out_dtype)


def _one_to_two_kernel(x_ref, o_ref, *, operation, flatten):
    """Full-S variant: one grid step writes a (tc, S, S) (or flat (tc, S*S)) tile."""
    v = _precondition(x_ref[0], operation)            # (tc, S)
    tc, s = v.shape

    if flatten:
        # S < 128: emit a lane-dense flat (tc, S*S) tile (built with lane
        # concatenation) so the store and the VMEM->HBM DMA are dense instead
        # of S-lane masked rows.
        if operation == "concat":
            o_ref[0, 0] = jnp.concatenate([v] * s, axis=-1).astype(o_ref.dtype)
            o_ref[0, 1] = jnp.concatenate(
                [jnp.broadcast_to(v[:, i:i + 1], (tc, s)) for i in range(s)],
                axis=-1).astype(o_ref.dtype)
        else:
            o_ref[0] = jnp.concatenate(
                [_combine(v, v[:, i:i + 1], operation, o_ref.dtype)
                 for i in range(s)],
                axis=-1)
    else:
        t1 = v.reshape(tc, 1, s)     # value depends on j (lane axis)
        t2 = v.reshape(tc, s, 1)     # value depends on i (sublane axis)
        if operation == "concat":
            o_ref[0, 0] = jnp.broadcast_to(t1, (tc, s, s)).astype(o_ref.dtype)
            o_ref[0, 1] = jnp.broadcast_to(t2, (tc, s, s)).astype(o_ref.dtype)
        else:
            o_ref[0] = _combine(t1, t2, operation, o_ref.dtype)


def _one_to_two_row_tiled_kernel(x_ref, xrow_ref, o_ref, *, operation):
    """Row-tiled variant for large S: one grid step writes a (tc, ts, S) tile."""
    v = _precondition(x_ref[0], operation)            # (tc, S)  j-dependent values
    vr = _precondition(xrow_ref[0], operation)        # (tc, ts) i-dependent values
    tc, s = v.shape
    ts = vr.shape[1]
    t1 = v.reshape(tc, 1, s)
    t2 = vr.reshape(tc, ts, 1)   # small lane->sublane relayout (ts values/channel)
    if operation == "concat":
        o_ref[0, 0] = jnp.broadcast_to(t1, (tc, ts, s)).astype(o_ref.dtype)
        o_ref[0, 1] = jnp.broadcast_to(t2, (tc, ts, s)).astype(o_ref.dtype)
    else:
        o_ref[0] = _combine(t1, t2, operation, o_ref.dtype)


# ---------------------------------------------------------------------------
# Wrapper.
# ---------------------------------------------------------------------------

def one_to_two(x: jax.Array, operation: str = "mean", *, _tile_override=None) -> jax.Array:
    """x: (B, C, S) -> OneToTwo.forward(x) with the given operation."""
    operation = operation.lower()
    if operation not in _OPS:
        raise ValueError(f"unknown operation: {operation!r}")

    B, C, S = x.shape
    dtype = x.dtype
    itemsize = jnp.dtype(dtype).itemsize
    out_planes = 2 if operation == "concat" else 1
    flatten = S < 128                       # lane-dense flat (S*S) output for small S
    sub = _sublane_multiple(itemsize)

    cap, budget, stretch = _vmem_budget()
    if _tile_override is not None:          # test hook / expert override
        tc, ts = _tile_override
        tc = min(int(tc), C)
        ts = min(int(ts), S)
        if tc < C:
            tc = max(sub, (tc // sub) * sub)
        if ts < S:
            ts = max(128, (ts // 128) * 128)
        ts = min(ts, S)
        if flatten:
            ts = S
    else:
        tc, ts = _plan_tiles(B, C, S, itemsize, out_planes, flatten, budget, stretch)

    row_tiled = ts < S
    grid = (B, pl.cdiv(C, tc), pl.cdiv(S, ts))

    in_specs = [pl.BlockSpec((1, tc, S), lambda b, c, r: (b, c, 0))]
    operands = [x]
    if row_tiled:
        # Second view of the same input delivers this row tile's values, so the
        # kernel never slices at a data-dependent lane offset and edge-partial
        # row tiles are handled by Pallas' partial-block machinery.
        in_specs.append(pl.BlockSpec((1, tc, ts), lambda b, c, r: (b, c, r)))
        operands.append(x)

    if operation == "concat":
        # Produce (B, 2, C, ...); the free contiguous reshape in the wrapper
        # reproduces torch.cat([twod1, twod2], dim=1) ordering.
        if flatten:
            out_shape = jax.ShapeDtypeStruct((B, 2, C, S * S), dtype)
            out_spec = pl.BlockSpec((1, 2, tc, S * S), lambda b, c, r: (b, 0, c, 0))
        else:
            out_shape = jax.ShapeDtypeStruct((B, 2, C, S, S), dtype)
            out_spec = pl.BlockSpec((1, 2, tc, ts, S), lambda b, c, r: (b, 0, c, r, 0))
    else:
        if flatten:
            out_shape = jax.ShapeDtypeStruct((B, C, S * S), dtype)
            out_spec = pl.BlockSpec((1, tc, S * S), lambda b, c, r: (b, c, 0))
        else:
            out_shape = jax.ShapeDtypeStruct((B, C, S, S), dtype)
            out_spec = pl.BlockSpec((1, tc, ts, S), lambda b, c, r: (b, c, r, 0))

    if row_tiled:
        kernel = functools.partial(_one_to_two_row_tiled_kernel, operation=operation)
    else:
        kernel = functools.partial(_one_to_two_kernel, operation=operation,
                                   flatten=flatten)

    footprint = _tile_footprint(tc, ts, S, itemsize, out_planes, flatten)
    vmem_limit = int(min(cap - (8 << 20), max(footprint + (8 << 20), 24 << 20)))

    out = pl.pallas_call(
        kernel,
        out_shape=out_shape,
        grid_spec=pltpu.PrefetchScalarGridSpec(
            num_scalar_prefetch=0,
            grid=grid,
            in_specs=in_specs,
            out_specs=out_spec,
        ),
        compiler_params=pltpu.CompilerParams(
            dimension_semantics=("parallel", "parallel", "parallel"),
            vmem_limit_bytes=vmem_limit,
        ),
    )(*operands)

    if operation == "concat":
        out = out.reshape(B, 2 * C, S, S)
    elif flatten:
        out = out.reshape(B, C, S, S)
    return out


# ---------------------------------------------------------------------------
# Reference + self-test.
# ---------------------------------------------------------------------------

def _reference(x: jax.Array, operation: str) -> jax.Array:
    B, C, S = x.shape
    twod1 = jnp.broadcast_to(x[:, :, None, :], (B, C, S, S))  # depends on j
    twod2 = jnp.broadcast_to(x[:, :, :, None], (B, C, S, S))  # depends on i
    if operation == "concat":
        return jnp.concatenate([twod1, twod2], axis=1)
    if operation == "multiply":
        return twod1 * twod2
    if operation == "multiply1":
        return (twod1 + 1) * (twod2 + 1) - 1
    if operation == "mean":
        return (twod1 + twod2) * 0.5
    if operation == "max":
        return jnp.maximum(twod1, twod2)
    raise ValueError(operation)


if __name__ == "__main__":
    key = jax.random.PRNGKey(0)
    k_small, k_med = jax.random.split(key)

    # Small module-scale shape: exercises the lane-dense flat-output path.
    B, C, S = 2, 4, 8
    x_small = jax.random.normal(k_small, (B, C, S), dtype=jnp.float32)
    for op in ("mean", "max", "multiply", "multiply1", "concat"):
        out = jax.block_until_ready(one_to_two(x_small, op))
        ref = _reference(x_small, op)
        assert out.shape == ref.shape, (op, out.shape, ref.shape)
        assert out.dtype == x_small.dtype, (op, out.dtype)
        assert jnp.allclose(out, ref, atol=1e-6, rtol=1e-6), f"mismatch for {op}"

    # 128-aligned S: exercises the full-(S,S) block path ...
    x_med = jax.random.normal(k_med, (2, 8, 256), dtype=jnp.float32)
    for op in ("mean", "concat"):
        out = jax.block_until_ready(one_to_two(x_med, op))
        assert jnp.allclose(out, _reference(x_med, op), atol=1e-6, rtol=1e-6), op
    # ... and a forced 128-row tile exercises the large-S row-tiled path.
    for op in ("multiply1", "concat"):
        out = jax.block_until_ready(one_to_two(x_med, op, _tile_override=(8, 128)))
        assert jnp.allclose(out, _reference(x_med, op), atol=1e-6, rtol=1e-6), op

    print("KERNEL_OK")
</pallas_src>

<mosaic_0001>
module attributes {stable_mosaic.version = 11 : i64} {
  func.func @_one_to_two_kernel(%arg0: i32, %arg1: i32, %arg2: i32, %arg3: memref<1x4x8xf32, #tpu.memory_space<vmem>>, %arg4: memref<1x4x64xf32, #tpu.memory_space<vmem>>) attributes {dimension_semantics = [#tpu.dimension_semantics<parallel>, #tpu.dimension_semantics<parallel>, #tpu.dimension_semantics<parallel>], iteration_bounds = array<i64: 2, 1, 1>, scalar_prefetch = 0 : i64, scratch_operands = 0 : i64, tpu.core_type = #tpu.core_type<tc>, window_params = [{transform_indices = @transform_0, window_bounds = array<i64: 1, 4, 8>}, {transform_indices = @transform_1, window_bounds = array<i64: 1, 4, 64>}]} {
    %c0 = arith.constant 0 : index
    %c0_0 = arith.constant 0 : index
    %c0_1 = arith.constant 0 : index
    %0 = vector.load %arg3[%c0, %c0_0, %c0_1] : memref<1x4x8xf32, #tpu.memory_space<vmem>>, vector<1x4x8xf32>
    %1 = vector.shape_cast %0 : vector<1x4x8xf32> to vector<4x8xf32>
    %cst = arith.constant 5.000000e-01 : f32
    %2 = vector.broadcast %cst : f32 to vector<4x8xf32>
    %3 = arith.mulf %1, %2 : vector<4x8xf32>
    %4 = vector.extract_strided_slice %3 {offsets = [0, 0], sizes = [4, 1], strides = [1, 1]} : vector<4x8xf32> to vector<4x1xf32>
    %5 = vector.broadcast %4 : vector<4x1xf32> to vector<4x8xf32>
    %6 = arith.addf %3, %5 : vector<4x8xf32>
    %7 = vector.extract_strided_slice %3 {offsets = [0, 1], sizes = [4, 1], strides = [1, 1]} : vector<4x8xf32> to vector<4x1xf32>
    %8 = vector.broadcast %7 : vector<4x1xf32> to vector<4x8xf32>
    %9 = arith.addf %3, %8 : vector<4x8xf32>
    %10 = vector.extract_strided_slice %3 {offsets = [0, 2], sizes = [4, 1], strides = [1, 1]} : vector<4x8xf32> to vector<4x1xf32>
    %11 = vector.broadcast %10 : vector<4x1xf32> to vector<4x8xf32>
    %12 = arith.addf %3, %11 : vector<4x8xf32>
    %13 = vector.extract_strided_slice %3 {offsets = [0, 3], sizes = [4, 1], strides = [1, 1]} : vector<4x8xf32> to vector<4x1xf32>
    %14 = vector.broadcast %13 : vector<4x1xf32> to vector<4x8xf32>
    %15 = arith.addf %3, %14 : vector<4x8xf32>
    %16 = vector.extract_strided_slice %3 {offsets = [0, 4], sizes = [4, 1], strides = [1, 1]} : vector<4x8xf32> to vector<4x1xf32>
    %17 = vector.broadcast %16 : vector<4x1xf32> to vector<4x8xf32>
    %18 = arith.addf %3, %17 : vector<4x8xf32>
    %19 = vector.extract_strided_slice %3 {offsets = [0, 5], sizes = [4, 1], strides = [1, 1]} : vector<4x8xf32> to vector<4x1xf32>
    %20 = vector.broadcast %19 : vector<4x1xf32> to vector<4x8xf32>
    %21 = arith.addf %3, %20 : vector<4x8xf32>
    %22 = vector.extract_strided_slice %3 {offsets = [0, 6], sizes = [4, 1], strides = [1, 1]} : vector<4x8xf32> to vector<4x1xf32>
    %23 = vector.broadcast %22 : vector<4x1xf32> to vector<4x8xf32>
    %24 = arith.addf %3, %23 : vector<4x8xf32>
    %25 = vector.extract_strided_slice %3 {offsets = [0, 7], sizes = [4, 1], strides = [1, 1]} : vector<4x8xf32> to vector<4x1xf32>
    %26 = vector.broadcast %25 : vector<4x1xf32> to vector<4x8xf32>
    %27 = arith.addf %3, %26 : vector<4x8xf32>
    %28 = tpu.concatenate %6, %9, %12, %15, %18, %21, %24, %27 in 1 : vector<4x8xf32>, vector<4x8xf32>, vector<4x8xf32>, vector<4x8xf32>, vector<4x8xf32>, vector<4x8xf32>, vector<4x8xf32>, vector<4x8xf32> -> vector<4x64xf32>
    %c0_2 = arith.constant 0 : index
    %c0_3 = arith.constant 0 : index
    %c0_4 = arith.constant 0 : index
    %29 = vector.load %arg4[%c0_2, %c0_3, %c0_4] : memref<1x4x64xf32, #tpu.memory_space<vmem>>, vector<1x4x64xf32>
    %30 = vector.shape_cast %29 : vector<1x4x64xf32> to vector<4x64xf32>
    %31 = vector.shape_cast %28 : vector<4x64xf32> to vector<1x4x64xf32>
    tpu.vector_store %arg4[%c0_2, %c0_3, %c0_4], %31 {strides = array<i32>} : memref<1x4x64xf32, #tpu.memory_space<vmem>>, vector<1x4x64xf32>,
    return
  }
  func.func @transform_0(%arg0: i32, %arg1: i32, %arg2: i32) -> (i32, i32, i32) {
    %c0_i32 = arith.constant 0 : i32
    %c0_i32_0 = arith.constant 0 : i32
    return %arg0, %arg1, %c0_i32 : i32, i32, i32
  }
  func.func @transform_1(%arg0: i32, %arg1: i32, %arg2: i32) -> (i32, i32, i32) {
    %c0_i32 = arith.constant 0 : i32
    %c0_i32_0 = arith.constant 0 : i32
    return %arg0, %arg1, %c0_i32 : i32, i32, i32
  }
}

</mosaic_0001>

<llo_original>
// kernel: tpu_custom_call.1
$region0: #{tpu_custom_call.1}
  #allocation0 [shape = 'u32[]', space=smem, size = 0x4, offset = 0x4, fixed_abs, tag = 'smem constant byte address 0x4 - core index']
  #allocation1 [shape = 'u32[144,128]{1,0:T(1,128)}', space=vmem, size = 0x12000, scoped, tag = 'internal scratch']
  %s0 = inlined_call_operand.hbm [shape: f32[2,4,8], index: 0, kind: input, shape index: {}]
  %s1 = inlined_call_operand.hbm [shape: f32[2,4,64], index: 1, kind: output, shape index: {}]
  %s2 = sld [smem:[#allocation0]]
  $region41: #{tpu_custom_call.1} parent=0
    _
  %s4 = ssub.s32 1, %s2
  %s5 = scalar_select 0, %s4, %s2
  $region1: #{tpu_custom_call.1} parent=0
    #allocation2 [shape = 'u8[4096]{0}', space=vmem, size = 0x1000, scoped, tag = 'input window, operand 0']
    #allocation3 [shape = 's32[2]{0}', space=sflag, size = 0x8, scoped, tag = 'scoped memory for tpu_custom_call.1']
    #allocation4 [shape = 's32[2]{0}', space=sflag, size = 0x8, scoped, tag = 'scoped memory for tpu_custom_call.1']
    #allocation5 [shape = 'u8[4096]{0}', space=vmem, size = 0x1000, scoped, tag = 'output window, operand 0']
    %6 = vsyncpa [#allocation3], 0
    %s7 = scalar_lea.sflag [#allocation3], 1
    %8 = vsyncpa %s7, 0
    %9 = vsyncpa [#allocation4], 0
    %s10 = scalar_lea.sflag [#allocation4], 1
    %11 = vsyncpa %s10, 0
    loop: start=0, step=1, limit=4
    $region2: #{tpu_custom_call.1} parent=1 // loop_pre_header
      _
    $region3: #{tpu_custom_call.1} parent=1 // loop_header
      %s13 = sphi 0, %s17
      %p14 = scmp.ge.s32.totalorder %s13, 4
      %s20 = sphi 0, %s39
      %s21 = sphi 0, %s35
      %s22 = sphi 0, %s31
      %s23 = sphi 0, %s20
      %s24 = sphi 0, %s21
      %s25 = sphi 0, %s22
      %s26 = sphi 0, %s23
      %s27 = sphi 0, %s24
      %s28 = sphi 0, %s25
      %s44 = sphi 0, %s46
      %s47 = sphi 0, %s44
      %s48 = sphi 0, %s47
      %s64 = sphi 0, %s48
      %s72 = sphi 0, %s74
      %s75 = sphi 0, %s72
      %s76 = sphi 0, %s75
      %s92 = sphi 0, %s76
    $region4: #{tpu_custom_call.1} parent=1 // loop_header_branch
      %16 = sbr.rel (%p14) target = $region8
    $region5: #{tpu_custom_call.1} parent=1 // loop_body
      %s18 = ssub.s32 %s13, 1
      %s19 = ssub.s32 %s13, 2
      %s29 = sadd.s32 1, %s22
      %p30 = scmp.ge.s32.totalorder %s29, 1
      %s31 = scalar_select %p30, 0, %s29
      %s32 = sadd.s32 1, %s21
      %s33 = scalar_select %p30, %s32, %s21
      %p34 = scmp.ge.s32.totalorder %s33, 1
      %s35 = scalar_select %p34, 0, %s33
      %s36 = sadd.s32 1, %s20
      %s37 = scalar_select %p34, %s36, %s20
      %p38 = scmp.ge.s32.totalorder %s37, 2
      %s39 = scalar_select %p38, 0, %s37
      %s40 = ssub.s32 %s20, %s39
      %s41 = ssub.s32 %s21, %s35
      %s42 = sor.u32 %s40, %s41
      %p43 = scmp.eq.s32.totalorder %s42, 0
      %s45 = sadd.s32 %s44, 1
      %s46 = scalar_select %p43, %s44, %s45
      %p49 = pneg %p43
      %p50 = scmp.eq.s32.totalorder %s13, 1
      %p51 = por %p49, %p50
      %p52 = scmp.ne.s32.totalorder %s44, %s47
      %p53 = scmp.eq.s32.totalorder %s13, 0
      %p54 = por %p52, %p53
      %p55 = scmp.ne.s32.totalorder %s44, %s47
      %p56 = scmp.eq.s32.totalorder %s18, 1
      %p57 = por %p55, %p56
      %p58 = scmp.ne.s32.totalorder %s47, %s48
      %p59 = scmp.eq.s32.totalorder %s18, 0
      %p60 = por %p58, %p59
      %p61 = scmp.ne.s32.totalorder %s47, %s48
      %p62 = scmp.eq.s32.totalorder %s19, 1
      %p63 = por %p61, %p62
      %p65 = scmp.ne.s32.totalorder %s48, %s64
      %p66 = scmp.eq.s32.totalorder %s19, 0
      %p67 = por %p65, %p66
      %s68 = ssub.s32 %s20, %s39
      %s69 = ssub.s32 %s21, %s35
      %s70 = sor.u32 %s68, %s69
      %p71 = scmp.eq.s32.totalorder %s70, 0
      %s73 = sadd.s32 %s72, 1
      %s74 = scalar_select %p71, %s72, %s73
      %p77 = pneg %p71
      %p78 = scmp.eq.s32.totalorder %s13, 1
      %p79 = por %p77, %p78
      %p80 = scmp.ne.s32.totalorder %s72, %s75
      %p81 = scmp.eq.s32.totalorder %s13, 0
      %p82 = por %p80, %p81
      %p83 = scmp.ne.s32.totalorder %s72, %s75
      %p84 = scmp.eq.s32.totalorder %s18, 1
      %p85 = por %p83, %p84
      %p86 = scmp.ne.s32.totalorder %s75, %s76
      %p87 = scmp.eq.s32.totalorder %s18, 0
      %p88 = por %p86, %p87
      %p89 = scmp.ne.s32.totalorder %s75, %s76
      %p90 = scmp.eq.s32.totalorder %s19, 1
      %p91 = por %p89, %p90
      %p93 = scmp.ne.s32.totalorder %s76, %s92
      %p94 = scmp.eq.s32.totalorder %s19, 0
      %p95 = por %p93, %p94
      %p96 = scmp.le.s32.totalorder 1, %s13
      %p97 = scmp.lt.s32.totalorder %s13, 3
      %p98 = pnand %p96, %p97
      %p99 = pneg %p98
      // Predicated region
      $region9: #{tpu_custom_call.1} parent=5 // pred_check
        _
      $region10: #{tpu_custom_call.1} parent=5 // pred_check_branch
        %101 = sbr.rel (%p98) target = $region12
      $region11: #{tpu_custom_call.1} parent=5 // pred_region
        %s102 = ssub.s32 %s13, 1
      $region12: #{tpu_custom_call.1} parent=5 // pred_fallthru
        _
      %p103 = scmp.lt.s32.totalorder %s13, 2
      // Predicated region
      $region13: #{tpu_custom_call.1} parent=5 // pred_check
        %p104 = pneg %p103
      $region14: #{tpu_custom_call.1} parent=5 // pred_check_branch
        %106 = sbr.rel (%p104) target = $region16
      $region15: #{tpu_custom_call.1} parent=5 // pred_region
        // Predicated region
        $region17: #{tpu_custom_call.1} parent=15 // pred_check
          %p107 = pneg %p54
        $region18: #{tpu_custom_call.1} parent=15 // pred_check_branch
          %109 = sbr.rel (%p107) target = $region20
        $region19: #{tpu_custom_call.1} parent=15 // pred_region
          %s110 = sand.u32 %s44, 1
          %s111 = scalar_lea.sflag [#allocation3], %s110
          %s112 = sand.u32 %s44, 1
          %s113 = smul.addr %s112, 4
          %s114 = scalar_lea.vmem [#allocation2], %s113
          %s116 = ssub.s32 64, 64
          %117 = vsyncadd %s111, %s116
          %s118 = sadd.s32 %s21, %s20
          %s119 = smul.addr %s118, 64
          %s120 = scalar_lea.hbm %s0, %s119
          %s122 = sshll.u32 %s114, 4
          %s123 = int_to_ptr.vmem [resolvable:$true] %s122
          %125 = dma.hbm_to_vmem [thread:$0]  %s120, 64, %s123, %s111
        $region20: #{tpu_custom_call.1} parent=15 // pred_fallthru
          _
      $region16: #{tpu_custom_call.1} parent=5 // pred_fallthru
        _
      %p126 = scmp.le.s32.totalorder 1, %s13
      %p127 = scmp.lt.s32.totalorder %s13, 3
      %p128 = pnand %p126, %p127
      %p129 = pneg %p128
      // Predicated region
      $region21: #{tpu_custom_call.1} parent=5 // pred_check
        _
      $region22: #{tpu_custom_call.1} parent=5 // pred_check_branch
        %131 = sbr.rel (%p128) target = $region24
      $region23: #{tpu_custom_call.1} parent=5 // pred_region
        %s132 = ssub.s32 %s13, 1
        %s133 = sand.u32 %s47, 1
        %s134 = scalar_lea.sflag [#allocation3], %s133
        %s135 = sand.u32 %s47, 1
        %s136 = smul.addr %s135, 4
        %s137 = scalar_lea.vmem [#allocation2], %s136
        // Predicated region
        $region25: #{tpu_custom_call.1} parent=23 // pred_check
          %p138 = pneg %p60
        $region26: #{tpu_custom_call.1} parent=23 // pred_check_branch
          %140 = sbr.rel (%p138) target = $region28
        $region27: #{tpu_custom_call.1} parent=23 // pred_region
          %141 = dma.done %s134, 64
        $region28: #{tpu_custom_call.1} parent=23 // pred_fallthru
          _
        %s142 = sand.u32 %s47, 1
        %s143 = scalar_lea.sflag [#allocation3], %s142
        %s144 = sand.u32 %s47, 1
        %s145 = smul.addr %s144, 4
        %s146 = scalar_lea.vmem [#allocation2], %s145
        %p147 = pneg %p60
        %p148 = pneg %p57
        %p149 = pneg %p88
        %p150 = pneg %p85
        %s151 = sand.u32 %s75, 1
        %s152 = scalar_lea.sflag [#allocation4], %s151
        %s153 = sand.u32 %s75, 1
        %s154 = smul.addr %s153, 4
        %s155 = scalar_lea.vmem [#allocation5], %s154
        %v156 = vld [vmem:[%s137] sm:$0xf]
        %v157 = vmul.f32 %v156, 0.5
        %159 = vset.pattern.permute.xlu0 0
        %160 = vperm.xlu0 %159, %v157
        %v161 = vpop.permute.xlu0 %160
        %v163 = vadd.f32 %v157, %v161
        %164 = vset.pattern.permute.xlu0 1
        %165 = vperm.xlu0 %164, %v157
        %v166 = vpop.permute.xlu0 %165
        %v168 = vadd.f32 %v157, %v166
        %169 = vset.pattern.permute.xlu0 2
        %170 = vperm.xlu0 %169, %v157
        %v171 = vpop.permute.xlu0 %170
        %v173 = vadd.f32 %v157, %v171
        %174 = vset.pattern.permute.xlu0 3
        %175 = vperm.xlu0 %174, %v157
        %v176 = vpop.permute.xlu0 %175
        %v178 = vadd.f32 %v157, %v176
        %179 = vset.pattern.permute.xlu0 4
        %180 = vperm.xlu0 %179, %v157
        %v181 = vpop.permute.xlu0 %180
        %v183 = vadd.f32 %v157, %v181
        %184 = vset.pattern.permute.xlu0 5
        %185 = vperm.xlu0 %184, %v157
        %v186 = vpop.permute.xlu0 %185
        %v188 = vadd.f32 %v157, %v186
        %189 = vset.pattern.permute.xlu0 6
        %190 = vperm.xlu0 %189, %v157
        %v191 = vpop.permute.xlu0 %190
        %v193 = vadd.f32 %v157, %v191
        %194 = vset.pattern.permute.xlu0 7
        %195 = vperm.xlu0 %194, %v157
        %v196 = vpop.permute.xlu0 %195
        %v198 = vadd.f32 %v157, %v196
        %200 = vrot.lane.b32.xlu0 %v168, 8
        %v201 = vpop.permute.xlu0 %200
        %204 = vrot.lane.b32.xlu0 %v173, 16
        %v205 = vpop.permute.xlu0 %204
        %208 = vrot.lane.b32.xlu0 %v178, 24
        %v209 = vpop.permute.xlu0 %208
        %212 = vrot.lane.b32.xlu0 %v183, 32
        %v213 = vpop.permute.xlu0 %212
        %216 = vrot.lane.b32.xlu0 %v188, 40
        %v217 = vpop.permute.xlu0 %216
        %220 = vrot.lane.b32.xlu0 %v193, 48
        %v221 = vpop.permute.xlu0 %220
        %224 = vrot.lane.b32.xlu0 %v198, 56
        %v225 = vpop.permute.xlu0 %224
        %vm227 = vcmask 64512
        %v228 = vsel %vm227, %v163, %v201
        %vm229 = vcmask 130048
        %v230 = vsel %vm229, %v228, %v205
        %vm231 = vcmask 195584
        %v232 = vsel %vm231, %v230, %v209
        %vm233 = vcmask 261120
        %v234 = vsel %vm233, %v232, %v213
        %vm235 = vcmask 326656
        %v236 = vsel %vm235, %v234, %v217
        %vm237 = vcmask 392192
        %v238 = vsel %vm237, %v236, %v221
        %vm239 = vcmask 457728
        %v240 = vsel %vm239, %v238, %v225
        %vm241 = vcmask 519168
        %242 = vst.msk [vmem:[%s155] sm:$0xf] %vm241, %v240
        %s243 = sand.u32 %s75, 1
        %s244 = scalar_lea.sflag [#allocation4], %s243
        %s245 = sand.u32 %s75, 1
        %s246 = smul.addr %s245, 4
        %s247 = scalar_lea.vmem [#allocation5], %s246
        // Predicated region
        $region29: #{tpu_custom_call.1} parent=23 // pred_check
          %p248 = pneg %p85
        $region30: #{tpu_custom_call.1} parent=23 // pred_check_branch
          %250 = sbr.rel (%p248) target = $region32
        $region31: #{tpu_custom_call.1} parent=23 // pred_region
          %s252 = ssub.s32 64, 64
          %253 = vsyncadd %s244, %s252
          %s254 = sadd.s32 %s24, %s23
          %s255 = smul.addr %s254, 64
          %s256 = scalar_lea.hbm %s1, %s255
          %s258 = sshll.u32 %s247, 4
          %s259 = int_to_ptr.vmem [resolvable:$true] %s258
          %261 = dma.vmem_to_hbm [thread:$0]  %s259, 64, %s256, %s244
        $region32: #{tpu_custom_call.1} parent=23 // pred_fallthru
          _
      $region24: #{tpu_custom_call.1} parent=5 // pred_fallthru
        _
      %p262 = scmp.le.s32.totalorder 2, %s13
      // Predicated region
      $region33: #{tpu_custom_call.1} parent=5 // pred_check
        %p263 = pneg %p262
      $region34: #{tpu_custom_call.1} parent=5 // pred_check_branch
        %265 = sbr.rel (%p263) target = $region36
      $region35: #{tpu_custom_call.1} parent=5 // pred_region
        %s266 = ssub.s32 %s13, 2
        // Predicated region
        $region37: #{tpu_custom_call.1} parent=35 // pred_check
          %p267 = pneg %p91
        $region38: #{tpu_custom_call.1} parent=35 // pred_check_branch
          %269 = sbr.rel (%p267) target = $region40
        $region39: #{tpu_custom_call.1} parent=35 // pred_region
          %s270 = sand.u32 %s76, 1
          %s271 = scalar_lea.sflag [#allocation4], %s270
          %s272 = sand.u32 %s76, 1
          %s273 = smul.addr %s272, 4
          %s274 = scalar_lea.vmem [#allocation5], %s273
          %275 = dma.done %s271, 64
        $region40: #{tpu_custom_call.1} parent=35 // pred_fallthru
          _
      $region36: #{tpu_custom_call.1} parent=5 // pred_fallthru
        _
    $region6: #{tpu_custom_call.1} parent=1 // loop_footer
      %s17 = sadd.s32 1, %s13
    $region7: #{tpu_custom_call.1} parent=1 // loop_footer_branch
      %12 = sbr.rel target = $region3
    $region8: #{tpu_custom_call.1} parent=1 // loop_exit
      _
    %276 = vsyncpa [#allocation3], 1
    %s277 = scalar_lea.sflag [#allocation3], 1
    %278 = vsyncpa %s277, 1
    %279 = vsyncpa [#allocation4], 1
    %s280 = scalar_lea.sflag [#allocation4], 1
    %281 = vsyncpa %s280, 1

</llo_original>
